<compile_context>
chip_gen: v7x
topology: tpu7x:2x2x1
jax: 0.10.0
libtpu: 0.0.40
codegen_flags: <defaults>
</compile_context>

<pallas_src>
import functools

import jax
import jax.numpy as jnp
from jax.experimental import pallas as pl
from jax.experimental.pallas import tpu as pltpu


def attn_kernel(mask_ref, x_ref, wq_ref, bq_ref, wkt_ref, bk_ref,
                wv_ref, bv_ref, o_ref):
    x = x_ref[...].astype(jnp.float32)                 # (tb, S, D)
    m = mask_ref[...]                                  # (tb, S) int32

    seq_len = jnp.sum(m, axis=1, keepdims=True)        # (tb, 1)
    pos = jax.lax.broadcasted_iota(jnp.int32, m.shape, 1)

    q_sel = (pos == seq_len - 1).astype(jnp.float32)   # one-hot: last valid position
    is_key = pos < (seq_len - 1)                       # keys: positions [0, sqlen-1)
    key_mask = is_key.astype(jnp.float32)

    # --- gather the query row (VPU mult + sublane reduce), project on MXU ---
    q_x = jnp.sum(q_sel[:, :, None] * x, axis=1)                          # (tb, D)
    q = jnp.dot(q_x, wq_ref[...], preferred_element_type=jnp.float32) + bq_ref[...]

    # --- scores[b,s] = q[b] . (x[b,s] @ Wk + bk)  without materializing K ---
    q_k = jnp.dot(q, wkt_ref[...], preferred_element_type=jnp.float32)    # (tb, D)
    scores = jnp.sum(q_k[:, None, :] * x, axis=2)                         # (tb, S)
    scores = scores + jnp.sum(q * bk_ref[...], axis=1, keepdims=True)

    # --- masked softmax over the valid key positions -------------------------
    scores = jnp.where(is_key, scores, jnp.float32(-1e30))
    smax = jnp.max(scores, axis=1, keepdims=True)
    e = jnp.exp(scores - smax) * key_mask
    denom = jnp.sum(e, axis=1, keepdims=True)
    p = e / jnp.maximum(denom, jnp.float32(1e-30))                        # (tb, S)

    # --- out = (sum_s p[b,s] x[b,s]) @ Wv + bv ; tanh ; one full-tile store --
    ctx = jnp.sum(p[:, :, None] * x, axis=1)                              # (tb, D)
    out = jnp.dot(ctx, wv_ref[...], preferred_element_type=jnp.float32) + bv_ref[...]
    o_ref[...] = jnp.tanh(out).astype(o_ref.dtype)
    # TODO(synk): nn.Dropout(p=0.5) is identity in eval mode; not applied here.


@functools.partial(jax.jit, static_argnames=("tb",))
def attention_forward(x, mask, wq, bq, wk, bk, wv, bv, *, tb=512):
    """x: (B,S,D); mask: (B,S) 0/1 prefix mask; w*: (D,Dout); b*: (1,Dout)."""
    B, S, D = x.shape
    Dout = wq.shape[1]
    mask = mask.astype(jnp.int32)
    wk_t = jnp.swapaxes(wk, 0, 1)              # (Dout, D): kernel forms q @ Wk^T

    if B <= tb:
        tb = B                                  # single tile, no padding
    else:
        tb = max(8, (tb // 8) * 8)              # sublane-aligned batch tile
    grid = pl.cdiv(B, tb)
    Bp = grid * tb
    if Bp != B:                                 # pad batch; padded rows sliced off
        x = jnp.pad(x, ((0, Bp - B), (0, 0), (0, 0)))
        mask = jnp.pad(mask, ((0, Bp - B), (0, 0)))

    def full(shape):
        return pl.BlockSpec(shape, lambda i: (0,) * len(shape))

    out = pl.pallas_call(
        attn_kernel,
        out_shape=jax.ShapeDtypeStruct((Bp, Dout), x.dtype),
        grid_spec=pltpu.PrefetchScalarGridSpec(
            num_scalar_prefetch=0,
            grid=(grid,),
            in_specs=[
                pl.BlockSpec((tb, S), lambda i: (i, 0)),        # mask tile
                pl.BlockSpec((tb, S, D), lambda i: (i, 0, 0)),  # x tile
                full((D, Dout)),                                 # Wq (in,out)
                full((1, Dout)),                                 # bq
                full((Dout, D)),                                 # Wk^T
                full((1, Dout)),                                 # bk
                full((D, Dout)),                                 # Wv (in,out)
                full((1, Dout)),                                 # bv
            ],
            out_specs=pl.BlockSpec((tb, Dout), lambda i: (i, 0)),
        ),
        compiler_params=pltpu.CompilerParams(
            dimension_semantics=("parallel",)),
    )(mask, x, wq, bq, wk_t, bk, wv, bv)
    return out[:B]


def reference_forward(x, mask, wq, bq, wk, bk, wv, bv, seq_lens):
    outs = []
    for i in range(x.shape[0]):
        sqlen = int(seq_lens[i])
        q = x[i, sqlen - 1][None, :] @ wq + bq          # (1, Dout)
        k = x[i, :sqlen - 1] @ wk + bk                  # (sqlen-1, Dout)
        v = x[i, :sqlen - 1] @ wv + bv
        p = jax.nn.softmax(q @ k.T, axis=-1)
        outs.append(p @ v)
    return jnp.tanh(jnp.concatenate(outs, axis=0))


if __name__ == "__main__":
    key = jax.random.PRNGKey(0)
    kx, kl, k1, k2, k3, k4, k5, k6 = jax.random.split(key, 8)

    B, S, D, Dout = 16, 8, 32, 32

    x = jax.random.normal(kx, (B, S, D), dtype=jnp.float32)
    # prefix mask with per-row valid length in [2, S] (>=2 so the key set is non-empty)
    seq_lens = jax.random.randint(kl, (B,), 2, S + 1)
    mask = (jnp.arange(S)[None, :] < seq_lens[:, None]).astype(jnp.int32)

    # nn.Linear params stored pre-transposed: y = x @ W + b  (W: (D, Dout)).
    wq = jax.random.normal(k1, (D, Dout), dtype=jnp.float32) * 0.15
    wk = jax.random.normal(k2, (D, Dout), dtype=jnp.float32) * 0.15
    wv = jax.random.normal(k3, (D, Dout), dtype=jnp.float32) * 0.15
    bq = jax.random.normal(k4, (1, Dout), dtype=jnp.float32) * 0.1
    bk = jax.random.normal(k5, (1, Dout), dtype=jnp.float32) * 0.1
    bv = jax.random.normal(k6, (1, Dout), dtype=jnp.float32) * 0.1

    # tb=8 exercises the tiled path (grid of 2 batch tiles) at small shapes.
    out = attention_forward(x, mask, wq, bq, wk, bk, wv, bv, tb=8)
    out = jax.block_until_ready(out)

    ref = reference_forward(x, mask, wq, bq, wk, bk, wv, bv, seq_lens)
    assert out.shape == (B, Dout)
    err = float(jnp.max(jnp.abs(out - ref)))
    assert jnp.allclose(out, ref, atol=1e-4, rtol=1e-4), f"mismatch vs reference: {err}"

    print("KERNEL_OK")
</pallas_src>

<mosaic_0001>
module attributes {stable_mosaic.version = 11 : i64} {
  func.func @attn_kernel(%arg0: i32, %arg1: memref<8x8xi32, #tpu.memory_space<vmem>>, %arg2: memref<8x8x32xf32, #tpu.memory_space<vmem>>, %arg3: memref<32x32xf32, #tpu.memory_space<vmem>>, %arg4: memref<1x32xf32, #tpu.memory_space<vmem>>, %arg5: memref<32x32xf32, #tpu.memory_space<vmem>>, %arg6: memref<1x32xf32, #tpu.memory_space<vmem>>, %arg7: memref<32x32xf32, #tpu.memory_space<vmem>>, %arg8: memref<1x32xf32, #tpu.memory_space<vmem>>, %arg9: memref<8x32xf32, #tpu.memory_space<vmem>>) attributes {dimension_semantics = [#tpu.dimension_semantics<parallel>], iteration_bounds = array<i64: 2>, scalar_prefetch = 0 : i64, scratch_operands = 0 : i64, tpu.core_type = #tpu.core_type<tc>, window_params = [{transform_indices = @transform_0, window_bounds = array<i64: 8, 8>}, {transform_indices = @transform_1, window_bounds = array<i64: 8, 8, 32>}, {pipeline_mode = #tpu.pipeline_mode<synchronous>, transform_indices = @transform_2, window_bounds = array<i64: 32, 32>}, {pipeline_mode = #tpu.pipeline_mode<synchronous>, transform_indices = @transform_3, window_bounds = array<i64: 1, 32>}, {pipeline_mode = #tpu.pipeline_mode<synchronous>, transform_indices = @transform_4, window_bounds = array<i64: 32, 32>}, {pipeline_mode = #tpu.pipeline_mode<synchronous>, transform_indices = @transform_5, window_bounds = array<i64: 1, 32>}, {pipeline_mode = #tpu.pipeline_mode<synchronous>, transform_indices = @transform_6, window_bounds = array<i64: 32, 32>}, {pipeline_mode = #tpu.pipeline_mode<synchronous>, transform_indices = @transform_7, window_bounds = array<i64: 1, 32>}, {transform_indices = @transform_8, window_bounds = array<i64: 8, 32>}]} {
    %c0 = arith.constant 0 : index
    %c0_0 = arith.constant 0 : index
    %c0_1 = arith.constant 0 : index
    %0 = vector.load %arg2[%c0, %c0_0, %c0_1] : memref<8x8x32xf32, #tpu.memory_space<vmem>>, vector<8x8x32xf32>
    %c0_2 = arith.constant 0 : index
    %c0_3 = arith.constant 0 : index
    %1 = vector.load %arg1[%c0_2, %c0_3] : memref<8x8xi32, #tpu.memory_space<vmem>>, vector<8x8xi32>
    %cst = arith.constant dense<0> : vector<8xi32>
    %2 = vector.multi_reduction <add>, %1, %cst [1] : vector<8x8xi32> to vector<8xi32>
    %3 = vector.shape_cast %2 : vector<8xi32> to vector<8x1xi32>
    %4 = tpu.iota {dimensions = array<i32: 1>} : vector<8x8xi32>
    %c1_i32 = arith.constant 1 : i32
    %5 = vector.broadcast %c1_i32 : i32 to vector<8x1xi32>
    %6 = arith.subi %3, %5 : vector<8x1xi32>
    %7 = vector.broadcast %6 : vector<8x1xi32> to vector<8x8xi32>
    %8 = arith.cmpi eq, %4, %7 : vector<8x8xi32>
    %9 = arith.extui %8 : vector<8x8xi1> to vector<8x8xi32>
    %10 = arith.sitofp %9 : vector<8x8xi32> to vector<8x8xf32>
    %c1_i32_4 = arith.constant 1 : i32
    %11 = vector.broadcast %c1_i32_4 : i32 to vector<8x1xi32>
    %12 = arith.subi %3, %11 : vector<8x1xi32>
    %13 = vector.broadcast %12 : vector<8x1xi32> to vector<8x8xi32>
    %14 = arith.cmpi slt, %4, %13 : vector<8x8xi32>
    %15 = arith.extui %14 : vector<8x8xi1> to vector<8x8xi32>
    %16 = arith.sitofp %15 : vector<8x8xi32> to vector<8x8xf32>
    %17 = vector.shape_cast %10 : vector<8x8xf32> to vector<8x8x1xf32>
    %18 = vector.broadcast %17 : vector<8x8x1xf32> to vector<8x8x32xf32>
    %19 = arith.mulf %18, %0 : vector<8x8x32xf32>
    %cst_5 = arith.constant dense<0.000000e+00> : vector<8x32xf32>
    %20 = vector.multi_reduction <add>, %19, %cst_5 [1] : vector<8x8x32xf32> to vector<8x32xf32>
    %c0_6 = arith.constant 0 : index
    %c0_7 = arith.constant 0 : index
    %21 = vector.load %arg3[%c0_6, %c0_7] : memref<32x32xf32, #tpu.memory_space<vmem>>, vector<32x32xf32>
    %cst_8 = arith.constant dense<0.000000e+00> : vector<8x32xf32>
    %22 = tpu.matmul %20, %21, %cst_8 {dimension_numbers = #tpu.dot_dimension_numbers<[1], [0], [0], [1], [0, 0, 1, 1], [], []>} : vector<8x32xf32>, vector<32x32xf32>, vector<8x32xf32> -> vector<8x32xf32>
    %c0_9 = arith.constant 0 : index
    %c0_10 = arith.constant 0 : index
    %23 = vector.load %arg4[%c0_9, %c0_10] : memref<1x32xf32, #tpu.memory_space<vmem>>, vector<1x32xf32>
    %24 = vector.broadcast %23 : vector<1x32xf32> to vector<8x32xf32>
    %25 = arith.addf %22, %24 : vector<8x32xf32>
    %c0_11 = arith.constant 0 : index
    %c0_12 = arith.constant 0 : index
    %26 = vector.load %arg5[%c0_11, %c0_12] : memref<32x32xf32, #tpu.memory_space<vmem>>, vector<32x32xf32>
    %cst_13 = arith.constant dense<0.000000e+00> : vector<8x32xf32>
    %27 = tpu.matmul %25, %26, %cst_13 {dimension_numbers = #tpu.dot_dimension_numbers<[1], [0], [0], [1], [0, 0, 1, 1], [], []>} : vector<8x32xf32>, vector<32x32xf32>, vector<8x32xf32> -> vector<8x32xf32>
    %28 = vector.shape_cast %27 : vector<8x32xf32> to vector<8x1x32xf32>
    %29 = vector.broadcast %28 : vector<8x1x32xf32> to vector<8x8x32xf32>
    %30 = arith.mulf %29, %0 : vector<8x8x32xf32>
    %cst_14 = arith.constant dense<0.000000e+00> : vector<8x8xf32>
    %31 = vector.multi_reduction <add>, %30, %cst_14 [2] : vector<8x8x32xf32> to vector<8x8xf32>
    %c0_15 = arith.constant 0 : index
    %c0_16 = arith.constant 0 : index
    %32 = vector.load %arg6[%c0_15, %c0_16] : memref<1x32xf32, #tpu.memory_space<vmem>>, vector<1x32xf32>
    %33 = vector.broadcast %32 : vector<1x32xf32> to vector<8x32xf32>
    %34 = arith.mulf %25, %33 : vector<8x32xf32>
    %cst_17 = arith.constant dense<0.000000e+00> : vector<8xf32>
    %35 = vector.multi_reduction <add>, %34, %cst_17 [1] : vector<8x32xf32> to vector<8xf32>
    %36 = vector.shape_cast %35 : vector<8xf32> to vector<8x1xf32>
    %37 = vector.broadcast %36 : vector<8x1xf32> to vector<8x8xf32>
    %38 = arith.addf %31, %37 : vector<8x8xf32>
    %cst_18 = arith.constant -1.000000e+30 : f32
    %39 = vector.broadcast %cst_18 : f32 to vector<8x8xf32>
    %40 = arith.select %14, %38, %39 : vector<8x8xi1>, vector<8x8xf32>
    %cst_19 = arith.constant dense<0xFF800000> : vector<8xf32>
    %41 = vector.multi_reduction <maximumf>, %40, %cst_19 [1] : vector<8x8xf32> to vector<8xf32>
    %42 = vector.shape_cast %41 : vector<8xf32> to vector<8x1xf32>
    %43 = vector.broadcast %42 : vector<8x1xf32> to vector<8x8xf32>
    %44 = arith.subf %40, %43 : vector<8x8xf32>
    %45 = math.exp %44 : vector<8x8xf32>
    %46 = arith.mulf %45, %16 : vector<8x8xf32>
    %cst_20 = arith.constant dense<0.000000e+00> : vector<8xf32>
    %47 = vector.multi_reduction <add>, %46, %cst_20 [1] : vector<8x8xf32> to vector<8xf32>
    %48 = vector.shape_cast %47 : vector<8xf32> to vector<8x1xf32>
    %cst_21 = arith.constant 1.000000e-30 : f32
    %49 = vector.broadcast %cst_21 : f32 to vector<8x1xf32>
    %50 = arith.maximumf %48, %49 : vector<8x1xf32>
    %51 = vector.broadcast %50 : vector<8x1xf32> to vector<8x8xf32>
    %52 = arith.divf %46, %51 : vector<8x8xf32>
    %53 = vector.shape_cast %52 : vector<8x8xf32> to vector<8x8x1xf32>
    %54 = vector.broadcast %53 : vector<8x8x1xf32> to vector<8x8x32xf32>
    %55 = arith.mulf %54, %0 : vector<8x8x32xf32>
    %cst_22 = arith.constant dense<0.000000e+00> : vector<8x32xf32>
    %56 = vector.multi_reduction <add>, %55, %cst_22 [1] : vector<8x8x32xf32> to vector<8x32xf32>
    %c0_23 = arith.constant 0 : index
    %c0_24 = arith.constant 0 : index
    %57 = vector.load %arg7[%c0_23, %c0_24] : memref<32x32xf32, #tpu.memory_space<vmem>>, vector<32x32xf32>
    %cst_25 = arith.constant dense<0.000000e+00> : vector<8x32xf32>
    %58 = tpu.matmul %56, %57, %cst_25 {dimension_numbers = #tpu.dot_dimension_numbers<[1], [0], [0], [1], [0, 0, 1, 1], [], []>} : vector<8x32xf32>, vector<32x32xf32>, vector<8x32xf32> -> vector<8x32xf32>
    %c0_26 = arith.constant 0 : index
    %c0_27 = arith.constant 0 : index
    %59 = vector.load %arg8[%c0_26, %c0_27] : memref<1x32xf32, #tpu.memory_space<vmem>>, vector<1x32xf32>
    %60 = vector.broadcast %59 : vector<1x32xf32> to vector<8x32xf32>
    %61 = arith.addf %58, %60 : vector<8x32xf32>
    %62 = math.tanh %61 : vector<8x32xf32>
    %c0_28 = arith.constant 0 : index
    %c0_29 = arith.constant 0 : index
    %63 = vector.load %arg9[%c0_28, %c0_29] : memref<8x32xf32, #tpu.memory_space<vmem>>, vector<8x32xf32>
    tpu.vector_store %arg9[%c0_28, %c0_29], %62 {strides = array<i32>} : memref<8x32xf32, #tpu.memory_space<vmem>>, vector<8x32xf32>,
    return
  }
  func.func @transform_0(%arg0: i32) -> (i32, i32) {
    %c0_i32 = arith.constant 0 : i32
    %c0_i32_0 = arith.constant 0 : i32
    return %arg0, %c0_i32 : i32, i32
  }
  func.func @transform_1(%arg0: i32) -> (i32, i32, i32) {
    %c0_i32 = arith.constant 0 : i32
    %c0_i32_0 = arith.constant 0 : i32
    %c0_i32_1 = arith.constant 0 : i32
    return %arg0, %c0_i32, %c0_i32_0 : i32, i32, i32
  }
  func.func @transform_2(%arg0: i32) -> (i32, i32) {
    %c0_i32 = arith.constant 0 : i32
    %c0_i32_0 = arith.constant 0 : i32
    %c0_i32_1 = arith.constant 0 : i32
    return %c0_i32, %c0_i32_0 : i32, i32
  }
  func.func @transform_3(%arg0: i32) -> (i32, i32) {
    %c0_i32 = arith.constant 0 : i32
    %c0_i32_0 = arith.constant 0 : i32
    %c0_i32_1 = arith.constant 0 : i32
    return %c0_i32, %c0_i32_0 : i32, i32
  }
  func.func @transform_4(%arg0: i32) -> (i32, i32) {
    %c0_i32 = arith.constant 0 : i32
    %c0_i32_0 = arith.constant 0 : i32
    %c0_i32_1 = arith.constant 0 : i32
    return %c0_i32, %c0_i32_0 : i32, i32
  }
  func.func @transform_5(%arg0: i32) -> (i32, i32) {
    %c0_i32 = arith.constant 0 : i32
    %c0_i32_0 = arith.constant 0 : i32
    %c0_i32_1 = arith.constant 0 : i32
    return %c0_i32, %c0_i32_0 : i32, i32
  }
  func.func @transform_6(%arg0: i32) -> (i32, i32) {
    %c0_i32 = arith.constant 0 : i32
    %c0_i32_0 = arith.constant 0 : i32
    %c0_i32_1 = arith.constant 0 : i32
    return %c0_i32, %c0_i32_0 : i32, i32
  }
  func.func @transform_7(%arg0: i32) -> (i32, i32) {
    %c0_i32 = arith.constant 0 : i32
    %c0_i32_0 = arith.constant 0 : i32
    %c0_i32_1 = arith.constant 0 : i32
    return %c0_i32, %c0_i32_0 : i32, i32
  }
  func.func @transform_8(%arg0: i32) -> (i32, i32) {
    %c0_i32 = arith.constant 0 : i32
    %c0_i32_0 = arith.constant 0 : i32
    return %arg0, %c0_i32 : i32, i32
  }
}

</mosaic_0001>

<llo_original>
// kernel: attention_forward.1
$region0: #{attention_forward.1}
  #allocation0 [shape = 'u32[]', space=smem, size = 0x4, offset = 0x4, fixed_abs, tag = 'smem constant byte address 0x4 - core index']
  #allocation1 [shape = 'u32[144,128]{1,0:T(1,128)}', space=vmem, size = 0x12000, scoped, tag = 'internal scratch']
  %s0 = inlined_call_operand.vmem [shape: s32[16,8], index: 0, kind: input, shape index: {}]
  %s1 = inlined_call_operand.hbm [shape: f32[16,8,32], index: 1, kind: input, shape index: {}]
  %s2 = inlined_call_operand.vmem [shape: f32[32,32], index: 2, kind: input, shape index: {}]
  %s3 = inlined_call_operand.vmem [shape: f32[1,32], index: 3, kind: input, shape index: {}]
  %s4 = inlined_call_operand.vmem [shape: f32[32,32], index: 4, kind: input, shape index: {}]
  %s5 = inlined_call_operand.vmem [shape: f32[1,32], index: 5, kind: input, shape index: {}]
  %s6 = inlined_call_operand.vmem [shape: f32[32,32], index: 6, kind: input, shape index: {}]
  %s7 = inlined_call_operand.vmem [shape: f32[1,32], index: 7, kind: input, shape index: {}]
  %s8 = inlined_call_operand.hbm [shape: f32[16,32], index: 8, kind: output, shape index: {}]
  %s9 = sld [smem:[#allocation0]]
  $region69: #{attention_forward.1} parent=0
    _
  %s11 = ssub.s32 1, %s9
  %s12 = scalar_select 0, %s11, %s9
  $region1: #{attention_forward.1} parent=0
    #allocation2 [shape = 'u8[65536]{0}', space=vmem, size = 0x10000, scoped, tag = 'input window, operand 1']
    #allocation3 [shape = 's32[2]{0}', space=sflag, size = 0x8, scoped, tag = 'scoped memory for attention_forward.1']
    #allocation4 [shape = 's32[2]{0}', space=sflag, size = 0x8, scoped, tag = 'scoped memory for attention_forward.1']
    #allocation5 [shape = 'u8[8192]{0}', space=vmem, size = 0x2000, scoped, tag = 'output window, operand 0']
    %13 = vsyncpa [#allocation3], 0
    %s14 = scalar_lea.sflag [#allocation3], 1
    %15 = vsyncpa %s14, 0
    %16 = vsyncpa [#allocation4], 0
    %s17 = scalar_lea.sflag [#allocation4], 1
    %18 = vsyncpa %s17, 0
    loop: start=0, step=1, limit=4
    $region2: #{attention_forward.1} parent=1 // loop_pre_header
      _
    $region3: #{attention_forward.1} parent=1 // loop_header
      %s20 = sphi 0, %s24
      %p21 = scmp.ge.s32.totalorder %s20, 4
      %s30 = sphi 0, %s32
      %s33 = sphi 0, %s30
      %s34 = sphi 0, %s33
      %s50 = sphi 0, %s34
      %s56 = sphi 0, %s58
      %s59 = sphi 0, %s56
      %s60 = sphi 0, %s59
      %s76 = sphi 0, %s60
      %s80 = sphi 0, %s80
      %s82 = sphi 0, %s80
      %s83 = sphi 0, %s82
      %s97 = sphi 0, %s83
      %s101 = sphi 0, %s101
      %s103 = sphi 0, %s101
      %s104 = sphi 0, %s103
      %s118 = sphi 0, %s104
      %s122 = sphi 0, %s122
      %s124 = sphi 0, %s122
      %s125 = sphi 0, %s124
      %s139 = sphi 0, %s125
      %s143 = sphi 0, %s143
      %s145 = sphi 0, %s143
      %s146 = sphi 0, %s145
      %s160 = sphi 0, %s146
      %s164 = sphi 0, %s164
      %s166 = sphi 0, %s164
      %s167 = sphi 0, %s166
      %s181 = sphi 0, %s167
      %s185 = sphi 0, %s185
      %s187 = sphi 0, %s185
      %s188 = sphi 0, %s187
      %s202 = sphi 0, %s188
      %s208 = sphi 0, %s210
      %s211 = sphi 0, %s208
      %s212 = sphi 0, %s211
      %s228 = sphi 0, %s212
    $region4: #{attention_forward.1} parent=1 // loop_header_branch
      %23 = sbr.rel (%p21) target = $region8
    $region5: #{attention_forward.1} parent=1 // loop_body
      %s25 = ssub.s32 %s20, 1
      %s26 = ssub.s32 %s20, 2
      %s27 = sadd.s32 %s20, 1
      %s28 = ssub.s32 %s20, %s27
      %p29 = scmp.eq.s32.totalorder %s28, 0
      %s31 = sadd.s32 %s30, 1
      %s32 = scalar_select %p29, %s30, %s31
      %p35 = pneg %p29
      %p36 = scmp.eq.s32.totalorder %s20, 1
      %p37 = por %p35, %p36
      %p38 = scmp.ne.s32.totalorder %s30, %s33
      %p39 = scmp.eq.s32.totalorder %s20, 0
      %p40 = por %p38, %p39
      %p41 = scmp.ne.s32.totalorder %s30, %s33
      %p42 = scmp.eq.s32.totalorder %s25, 1
      %p43 = por %p41, %p42
      %p44 = scmp.ne.s32.totalorder %s33, %s34
      %p45 = scmp.eq.s32.totalorder %s25, 0
      %p46 = por %p44, %p45
      %p47 = scmp.ne.s32.totalorder %s33, %s34
      %p48 = scmp.eq.s32.totalorder %s26, 1
      %p49 = por %p47, %p48
      %p51 = scmp.ne.s32.totalorder %s34, %s50
      %p52 = scmp.eq.s32.totalorder %s26, 0
      %p53 = por %p51, %p52
      %s54 = ssub.s32 %s20, %s27
      %p55 = scmp.eq.s32.totalorder %s54, 0
      %s57 = sadd.s32 %s56, 1
      %s58 = scalar_select %p55, %s56, %s57
      %p61 = pneg %p55
      %p62 = scmp.eq.s32.totalorder %s20, 1
      %p63 = por %p61, %p62
      %p64 = scmp.ne.s32.totalorder %s56, %s59
      %p65 = scmp.eq.s32.totalorder %s20, 0
      %p66 = por %p64, %p65
      %p67 = scmp.ne.s32.totalorder %s56, %s59
      %p68 = scmp.eq.s32.totalorder %s25, 1
      %p69 = por %p67, %p68
      %p70 = scmp.ne.s32.totalorder %s59, %s60
      %p71 = scmp.eq.s32.totalorder %s25, 0
      %p72 = por %p70, %p71
      %p73 = scmp.ne.s32.totalorder %s59, %s60
      %p74 = scmp.eq.s32.totalorder %s26, 1
      %p75 = por %p73, %p74
      %p77 = scmp.ne.s32.totalorder %s60, %s76
      %p78 = scmp.eq.s32.totalorder %s26, 0
      %p79 = por %p77, %p78
      %s81 = sadd.s32 %s80, 1
      %p84 = scmp.eq.s32.totalorder %s20, 1
      %p85 = scmp.ne.s32.totalorder %s80, %s82
      %p86 = scmp.eq.s32.totalorder %s20, 0
      %p87 = por %p85, %p86
      %p88 = scmp.ne.s32.totalorder %s80, %s82
      %p89 = scmp.eq.s32.totalorder %s25, 1
      %p90 = por %p88, %p89
      %p91 = scmp.ne.s32.totalorder %s82, %s83
      %p92 = scmp.eq.s32.totalorder %s25, 0
      %p93 = por %p91, %p92
      %p94 = scmp.ne.s32.totalorder %s82, %s83
      %p95 = scmp.eq.s32.totalorder %s26, 1
      %p96 = por %p94, %p95
      %p98 = scmp.ne.s32.totalorder %s83, %s97
      %p99 = scmp.eq.s32.totalorder %s26, 0
      %p100 = por %p98, %p99
      %s102 = sadd.s32 %s101, 1
      %p105 = scmp.eq.s32.totalorder %s20, 1
      %p106 = scmp.ne.s32.totalorder %s101, %s103
      %p107 = scmp.eq.s32.totalorder %s20, 0
      %p108 = por %p106, %p107
      %p109 = scmp.ne.s32.totalorder %s101, %s103
      %p110 = scmp.eq.s32.totalorder %s25, 1
      %p111 = por %p109, %p110
      %p112 = scmp.ne.s32.totalorder %s103, %s104
      %p113 = scmp.eq.s32.totalorder %s25, 0
      %p114 = por %p112, %p113
      %p115 = scmp.ne.s32.totalorder %s103, %s104
      %p116 = scmp.eq.s32.totalorder %s26, 1
      %p117 = por %p115, %p116
      %p119 = scmp.ne.s32.totalorder %s104, %s118
      %p120 = scmp.eq.s32.totalorder %s26, 0
      %p121 = por %p119, %p120
      %s123 = sadd.s32 %s122, 1
      %p126 = scmp.eq.s32.totalorder %s20, 1
      %p127 = scmp.ne.s32.totalorder %s122, %s124
      %p128 = scmp.eq.s32.totalorder %s20, 0
      %p129 = por %p127, %p128
      %p130 = scmp.ne.s32.totalorder %s122, %s124
      %p131 = scmp.eq.s32.totalorder %s25, 1
      %p132 = por %p130, %p131
      %p133 = scmp.ne.s32.totalorder %s124, %s125
      %p134 = scmp.eq.s32.totalorder %s25, 0
      %p135 = por %p133, %p134
      %p136 = scmp.ne.s32.totalorder %s124, %s125
      %p137 = scmp.eq.s32.totalorder %s26, 1
      %p138 = por %p136, %p137
      %p140 = scmp.ne.s32.totalorder %s125, %s139
      %p141 = scmp.eq.s32.totalorder %s26, 0
      %p142 = por %p140, %p141
      %s144 = sadd.s32 %s143, 1
      %p147 = scmp.eq.s32.totalorder %s20, 1
      %p148 = scmp.ne.s32.totalorder %s143, %s145
      %p149 = scmp.eq.s32.totalorder %s20, 0
      %p150 = por %p148, %p149
      %p151 = scmp.ne.s32.totalorder %s143, %s145
      %p152 = scmp.eq.s32.totalorder %s25, 1
      %p153 = por %p151, %p152
      %p154 = scmp.ne.s32.totalorder %s145, %s146
      %p155 = scmp.eq.s32.totalorder %s25, 0
      %p156 = por %p154, %p155
      %p157 = scmp.ne.s32.totalorder %s145, %s146
      %p158 = scmp.eq.s32.totalorder %s26, 1
      %p159 = por %p157, %p158
      %p161 = scmp.ne.s32.totalorder %s146, %s160
      %p162 = scmp.eq.s32.totalorder %s26, 0
      %p163 = por %p161, %p162
      %s165 = sadd.s32 %s164, 1
      %p168 = scmp.eq.s32.totalorder %s20, 1
      %p169 = scmp.ne.s32.totalorder %s164, %s166
      %p170 = scmp.eq.s32.totalorder %s20, 0
      %p171 = por %p169, %p170
      %p172 = scmp.ne.s32.totalorder %s164, %s166
      %p173 = scmp.eq.s32.totalorder %s25, 1
      %p174 = por %p172, %p173
      %p175 = scmp.ne.s32.totalorder %s166, %s167
      %p176 = scmp.eq.s32.totalorder %s25, 0
      %p177 = por %p175, %p176
      %p178 = scmp.ne.s32.totalorder %s166, %s167
      %p179 = scmp.eq.s32.totalorder %s26, 1
      %p180 = por %p178, %p179
      %p182 = scmp.ne.s32.totalorder %s167, %s181
      %p183 = scmp.eq.s32.totalorder %s26, 0
      %p184 = por %p182, %p183
      %s186 = sadd.s32 %s185, 1
      %p189 = scmp.eq.s32.totalorder %s20, 1
      %p190 = scmp.ne.s32.totalorder %s185, %s187
      %p191 = scmp.eq.s32.totalorder %s20, 0
      %p192 = por %p190, %p191
      %p193 = scmp.ne.s32.totalorder %s185, %s187
      %p194 = scmp.eq.s32.totalorder %s25, 1
      %p195 = por %p193, %p194
      %p196 = scmp.ne.s32.totalorder %s187, %s188
      %p197 = scmp.eq.s32.totalorder %s25, 0
      %p198 = por %p196, %p197
      %p199 = scmp.ne.s32.totalorder %s187, %s188
      %p200 = scmp.eq.s32.totalorder %s26, 1
      %p201 = por %p199, %p200
      %p203 = scmp.ne.s32.totalorder %s188, %s202
      %p204 = scmp.eq.s32.totalorder %s26, 0
      %p205 = por %p203, %p204
      %s206 = ssub.s32 %s20, %s27
      %p207 = scmp.eq.s32.totalorder %s206, 0
      %s209 = sadd.s32 %s208, 1
      %s210 = scalar_select %p207, %s208, %s209
      %p213 = pneg %p207
      %p214 = scmp.eq.s32.totalorder %s20, 1
      %p215 = por %p213, %p214
      %p216 = scmp.ne.s32.totalorder %s208, %s211
      %p217 = scmp.eq.s32.totalorder %s20, 0
      %p218 = por %p216, %p217
      %p219 = scmp.ne.s32.totalorder %s208, %s211
      %p220 = scmp.eq.s32.totalorder %s25, 1
      %p221 = por %p219, %p220
      %p222 = scmp.ne.s32.totalorder %s211, %s212
      %p223 = scmp.eq.s32.totalorder %s25, 0
      %p224 = por %p222, %p223
      %p225 = scmp.ne.s32.totalorder %s211, %s212
      %p226 = scmp.eq.s32.totalorder %s26, 1
      %p227 = por %p225, %p226
      %p229 = scmp.ne.s32.totalorder %s212, %s228
      %p230 = scmp.eq.s32.totalorder %s26, 0
      %p231 = por %p229, %p230
      %p232 = scmp.le.s32.totalorder 1, %s20
      %p233 = scmp.lt.s32.totalorder %s20, 3
      %p234 = pnand %p232, %p233
      %p235 = pneg %p234
      // Predicated region
      $region9: #{attention_forward.1} parent=5 // pred_check
        _
      $region10: #{attention_forward.1} parent=5 // pred_check_branch
        %237 = sbr.rel (%p234) target = $region12
      $region11: #{attention_forward.1} parent=5 // pred_region
        %s238 = ssub.s32 %s20, 1
        // Predicated region
        $region13: #{attention_forward.1} parent=11 // pred_check
          %p239 = pneg %p93
        $region14: #{attention_forward.1} parent=11 // pred_check_branch
          %241 = sbr.rel (%p239) target = $region16
        $region15: #{attention_forward.1} parent=11 // pred_region
          _
        $region16: #{attention_forward.1} parent=11 // pred_fallthru
          _
        // Predicated region
        $region17: #{attention_forward.1} parent=11 // pred_check
          %p242 = pneg %p114
        $region18: #{attention_forward.1} parent=11 // pred_check_branch
          %244 = sbr.rel (%p242) target = $region20
        $region19: #{attention_forward.1} parent=11 // pred_region
          _
        $region20: #{attention_forward.1} parent=11 // pred_fallthru
          _
        // Predicated region
        $region21: #{attention_forward.1} parent=11 // pred_check
          %p245 = pneg %p135
        $region22: #{attention_forward.1} parent=11 // pred_check_branch
          %247 = sbr.rel (%p245) target = $region24
        $region23: #{attention_forward.1} parent=11 // pred_region
          _
        $region24: #{attention_forward.1} parent=11 // pred_fallthru
          _
        // Predicated region
        $region25: #{attention_forward.1} parent=11 // pred_check
          %p248 = pneg %p156
        $region26: #{attention_forward.1} parent=11 // pred_check_branch
          %250 = sbr.rel (%p248) target = $region28
        $region27: #{attention_forward.1} parent=11 // pred_region
          _
        $region28: #{attention_forward.1} parent=11 // pred_fallthru
          _
        // Predicated region
        $region29: #{attention_forward.1} parent=11 // pred_check
          %p251 = pneg %p177
        $region30: #{attention_forward.1} parent=11 // pred_check_branch
          %253 = sbr.rel (%p251) target = $region32
        $region31: #{attention_forward.1} parent=11 // pred_region
          _
        $region32: #{attention_forward.1} parent=11 // pred_fallthru
          _
        // Predicated region
        $region33: #{attention_forward.1} parent=11 // pred_check
          %p254 = pneg %p198
        $region34: #{attention_forward.1} parent=11 // pred_check_branch
          %256 = sbr.rel (%p254) target = $region36
        $region35: #{attention_forward.1} parent=11 // pred_region
          _
        $region36: #{attention_forward.1} parent=11 // pred_fallthru
          _
      $region12: #{attention_forward.1} parent=5 // pred_fallthru
        _
      %p257 = scmp.lt.s32.totalorder %s20, 2
      // Predicated region
      $region37: #{attention_forward.1} parent=5 // pred_check
        %p258 = pneg %p257
      $region38: #{attention_forward.1} parent=5 // pred_check_branch
        %260 = sbr.rel (%p258) target = $region40
      $region39: #{attention_forward.1} parent=5 // pred_region
        // Predicated region
        $region41: #{attention_forward.1} parent=39 // pred_check
          %p261 = pneg %p40
        $region42: #{attention_forward.1} parent=39 // pred_check_branch
          %263 = sbr.rel (%p261) target = $region44
        $region43: #{attention_forward.1} parent=39 // pred_region
          %p264 = scmp.lt.s32.totalorder %s20, 1
          %s265 = scalar_select %p264, %s20, 1
          %s266 = smul.addr %s265, 8
          %s267 = scalar_lea.vmem %s0, %s266
        $region44: #{attention_forward.1} parent=39 // pred_fallthru
          _
        // Predicated region
        $region45: #{attention_forward.1} parent=39 // pred_check
          %p268 = pneg %p66
        $region46: #{attention_forward.1} parent=39 // pred_check_branch
          %270 = sbr.rel (%p268) target = $region48
        $region47: #{attention_forward.1} parent=39 // pred_region
          %s271 = sand.u32 %s56, 1
          %s272 = scalar_lea.sflag [#allocation3], %s271
          %s273 = sand.u32 %s56, 1
          %s274 = smul.addr %s273, 64
          %s275 = scalar_lea.vmem [#allocation2], %s274
          %s276 = smul.u32 8, %s20
          %s278 = ssub.s32 1024, 1024
          %279 = vsyncadd %s272, %s278
          %s280 = smul.addr %s276, 128
          %s281 = scalar_lea.hbm %s1, %s280
          %s282 = sshll.u32 %s275, 4
          %s283 = int_to_ptr.vmem [resolvable:$true] %s282
          %288 = dma.hbm_to_vmem [thread:$0]  %s281, 1024, %s283, %s272, 128, 128, 8
        $region48: #{attention_forward.1} parent=39 // pred_fallthru
          _
      $region40: #{attention_forward.1} parent=5 // pred_fallthru
        _
      %p289 = scmp.le.s32.totalorder 1, %s20
      %p290 = scmp.lt.s32.totalorder %s20, 3
      %p291 = pnand %p289, %p290
      %p292 = pneg %p291
      // Predicated region
      $region49: #{attention_forward.1} parent=5 // pred_check
        _
      $region50: #{attention_forward.1} parent=5 // pred_check_branch
        %294 = sbr.rel (%p291) target = $region52
      $region51: #{attention_forward.1} parent=5 // pred_region
        %s295 = ssub.s32 %s20, 1
        %s296 = sand.u32 %s59, 1
        %s297 = scalar_lea.sflag [#allocation3], %s296
        %s298 = sand.u32 %s59, 1
        %s299 = smul.addr %s298, 64
        %s300 = scalar_lea.vmem [#allocation2], %s299
        // Predicated region
        $region53: #{attention_forward.1} parent=51 // pred_check
          %p301 = pneg %p72
        $region54: #{attention_forward.1} parent=51 // pred_check_branch
          %303 = sbr.rel (%p301) target = $region56
        $region55: #{attention_forward.1} parent=51 // pred_region
          %304 = dma.done %s297, 1024
        $region56: #{attention_forward.1} parent=51 // pred_fallthru
          _
        %p305 = scmp.lt.s32.totalorder %s25, 1
        %s306 = scalar_select %p305, %s25, 1
        %s307 = smul.addr %s306, 8
        %s308 = scalar_lea.vmem %s0, %s307
        %p309 = pneg %p46
        %p310 = pneg %p43
        %s311 = sand.u32 %s59, 1
        %s312 = scalar_lea.sflag [#allocation3], %s311
        %s313 = sand.u32 %s59, 1
        %s314 = smul.addr %s313, 64
        %s315 = scalar_lea.vmem [#allocation2], %s314
        %p316 = pneg %p72
        %p317 = pneg %p69
        %p318 = pneg %p93
        %p319 = pneg %p90
        %p320 = pneg %p114
        %p321 = pneg %p111
        %p322 = pneg %p135
        %p323 = pneg %p132
        %p324 = pneg %p156
        %p325 = pneg %p153
        %p326 = pneg %p177
        %p327 = pneg %p174
        %p328 = pneg %p198
        %p329 = pneg %p195
        %p330 = pneg %p224
        %p331 = pneg %p221
        %s332 = sand.u32 %s211, 1
        %s333 = scalar_lea.sflag [#allocation4], %s332
        %s334 = sand.u32 %s211, 1
        %s335 = smul.addr %s334, 8
        %s336 = scalar_lea.vmem [#allocation5], %s335
        %p337 = scmp.lt.s32.totalorder %s25, 1
        %s338 = scalar_select %p337, %s25, 1
        %s339 = smul.addr %s338, 8
        %s340 = scalar_lea.vmem %s0, %s339
        %s341 = smul.u32 8, %s25
        %v342 = vld [vmem:[%s300] sm:$0xff]
        %v343 = vld [vmem:[%s300 + $0x8] sm:$0xff]
        %v344 = vld [vmem:[%s300 + $0x10] sm:$0xff]
        %v345 = vld [vmem:[%s300 + $0x18] sm:$0xff]
        %v346 = vld [vmem:[%s300 + $0x20] sm:$0xff]
        %v347 = vld [vmem:[%s300 + $0x28] sm:$0xff]
        %v348 = vld [vmem:[%s300 + $0x30] sm:$0xff]
        %v349 = vld [vmem:[%s300 + $0x38] sm:$0xff]
        %v350 = vld [vmem:[%s340] sm:$0xff]
        %vm351 = vcmask 64512
        %v352 = vsel %vm351, %v350, 0
        %v353 = vand.u32 %v352, 65535
        %v354 = vshrl.u32 %v352, 16
        %v355 = vcvt.s32.f32 %v353
        %v356 = vcvt.s32.f32 %v354
        %357 = vadd.xlane.f32.xlu0 %v355
        %v358 = vpop.xlane.xlu0 %357
        %359 = vadd.xlane.f32.xlu0 %v356
        %v360 = vpop.xlane.xlu0 %359
        %v361 = vcvt.f32.s32 %v358
        %v362 = vcvt.f32.s32 %v360
        %v363 = vshll.u32 %v362, 16
        %v364 = vadd.s32 %v363, %v361
        %v365 = vlaneseq
        %v366 = vand.u32 %v365, 127
        %v367 = vsub.s32 %v364, 1
        %vm368 = vcmp.eq.s32.totalorder %v366, %v367
        %v369 = vsel %vm368, 1, 0
        %v370 = vcvt.s32.f32 %v369
        %vm371 = vcmp.lt.s32.totalorder %v366, %v367
        %v372 = vsel %vm371, 1, 0
        %v373 = vcvt.s32.f32 %v372
        %v374 = vlaneseq
        %v375 = vshrl.u32 %v374, 7
        %v376 = vsub.s32 0, %v375
        %v377 = vrot.slane %v370, %v376
        %379 = vbcast.lane.b32.xlu0 %v377, 256
        %v380 = vpop.permute.xlu0 %379
        %v381 = vlaneseq
        %v382 = vshrl.u32 %v381, 7
        %v383 = vsub.s32 1, %v382
        %v384 = vrot.slane %v370, %v383
        %386 = vbcast.lane.b32.xlu0 %v384, 256
        %v387 = vpop.permute.xlu0 %386
        %v388 = vlaneseq
        %v389 = vshrl.u32 %v388, 7
        %v390 = vsub.s32 2, %v389
        %v391 = vrot.slane %v370, %v390
        %393 = vbcast.lane.b32.xlu0 %v391, 256
        %v394 = vpop.permute.xlu0 %393
        %v395 = vlaneseq
        %v396 = vshrl.u32 %v395, 7
        %v397 = vsub.s32 3, %v396
        %v398 = vrot.slane %v370, %v397
        %400 = vbcast.lane.b32.xlu0 %v398, 256
        %v401 = vpop.permute.xlu0 %400
        %v402 = vlaneseq
        %v403 = vshrl.u32 %v402, 7
        %v404 = vsub.s32 4, %v403
        %v405 = vrot.slane %v370, %v404
        %407 = vbcast.lane.b32.xlu0 %v405, 256
        %v408 = vpop.permute.xlu0 %407
        %v409 = vlaneseq
        %v410 = vshrl.u32 %v409, 7
        %v411 = vsub.s32 5, %v410
        %v412 = vrot.slane %v370, %v411
        %414 = vbcast.lane.b32.xlu0 %v412, 256
        %v415 = vpop.permute.xlu0 %414
        %v416 = vlaneseq
        %v417 = vshrl.u32 %v416, 7
        %v418 = vsub.s32 6, %v417
        %v419 = vrot.slane %v370, %v418
        %421 = vbcast.lane.b32.xlu0 %v419, 256
        %v422 = vpop.permute.xlu0 %421
        %v423 = vlaneseq
        %v424 = vshrl.u32 %v423, 7
        %v425 = vsub.s32 7, %v424
        %v426 = vrot.slane %v370, %v425
        %428 = vbcast.lane.b32.xlu0 %v426, 256
        %v429 = vpop.permute.xlu0 %428
        %v430 = vmul.f32 %v380, %v342
        %v431 = vmul.f32 %v387, %v343
        %v432 = vmul.f32 %v394, %v344
        %v433 = vmul.f32 %v401, %v345
        %v434 = vmul.f32 %v408, %v346
        %v435 = vmul.f32 %v415, %v347
        %v436 = vmul.f32 %v422, %v348
        %v437 = vmul.f32 %v429, %v349
        %vm438 = vcmask 261120
        %v439 = vsel %vm438, %v430, 0.0
        %v440 = vrot.slane %v439, 4
        %v441 = vadd.f32 %v439, %v440
        %v442 = vrot.slane %v441, 2
        %v443 = vadd.f32 %v441, %v442
        %v444 = vrot.slane %v443, 1
        %v445 = vadd.f32 %v443, %v444
        %v446 = vsel %vm438, %v431, 0.0
        %v447 = vrot.slane %v446, 4
        %v448 = vadd.f32 %v446, %v447
        %v449 = vrot.slane %v448, 2
        %v450 = vadd.f32 %v448, %v449
        %v451 = vrot.slane %v450, 1
        %v452 = vadd.f32 %v450, %v451
        %v453 = vsel %vm438, %v432, 0.0
        %v454 = vrot.slane %v453, 4
        %v455 = vadd.f32 %v453, %v454
        %v456 = vrot.slane %v455, 2
        %v457 = vadd.f32 %v455, %v456
        %v458 = vrot.slane %v457, 1
        %v459 = vadd.f32 %v457, %v458
        %v460 = vsel %vm438, %v433, 0.0
        %v461 = vrot.slane %v460, 4
        %v462 = vadd.f32 %v460, %v461
        %v463 = vrot.slane %v462, 2
        %v464 = vadd.f32 %v462, %v463
        %v465 = vrot.slane %v464, 1
        %v466 = vadd.f32 %v464, %v465
        %v467 = vsel %vm438, %v434, 0.0
        %v468 = vrot.slane %v467, 4
        %v469 = vadd.f32 %v467, %v468
        %v470 = vrot.slane %v469, 2
        %v471 = vadd.f32 %v469, %v470
        %v472 = vrot.slane %v471, 1
        %v473 = vadd.f32 %v471, %v472
        %v474 = vsel %vm438, %v435, 0.0
        %v475 = vrot.slane %v474, 4
        %v476 = vadd.f32 %v474, %v475
        %v477 = vrot.slane %v476, 2
        %v478 = vadd.f32 %v476, %v477
        %v479 = vrot.slane %v478, 1
        %v480 = vadd.f32 %v478, %v479
        %v481 = vsel %vm438, %v436, 0.0
        %v482 = vrot.slane %v481, 4
        %v483 = vadd.f32 %v481, %v482
        %v484 = vrot.slane %v483, 2
        %v485 = vadd.f32 %v483, %v484
        %v486 = vrot.slane %v485, 1
        %v487 = vadd.f32 %v485, %v486
        %v488 = vsel %vm438, %v437, 0.0
        %v489 = vrot.slane %v488, 4
        %v490 = vadd.f32 %v488, %v489
        %v491 = vrot.slane %v490, 2
        %v492 = vadd.f32 %v490, %v491
        %v493 = vrot.slane %v492, 1
        %v494 = vadd.f32 %v492, %v493
        %v495 = vld [vmem:[%s2] sm:$0xff]
        %v496 = vld [vmem:[%s2 + $0x8] sm:$0xff]
        %v497 = vld [vmem:[%s2 + $0x10] sm:$0xff]
        %v498 = vld [vmem:[%s2 + $0x18] sm:$0xff]
        %v499 = vld [vmem:[%s3] sm:$0x1]
        %v501 = vlaneseq
        %v502 = vshrl.u32 %v501, 7
        %v503 = vsub.s32 0, %v502
        %v504 = vrot.slane %v499, %v503
        %vm514 = vcmask 1041409
        %v515 = vsel %vm514, %v452, %v445
        %vm516 = vcmask 1042434
        %v517 = vsel %vm516, %v459, %v515
        %vm518 = vcmask 1043459
        %v519 = vsel %vm518, %v466, %v517
        %vm520 = vcmask 1044484
        %v521 = vsel %vm520, %v473, %v519
        %vm522 = vcmask 1045509
        %v523 = vsel %vm522, %v480, %v521
        %vm524 = vcmask 1046534
        %v525 = vsel %vm524, %v487, %v523
        %vm526 = vcmask 1047559
        %v527 = vsel %vm526, %v494, %v525
        %v528 = vsel %vm438, %v527, 0
        %530 = vmatprep.subr.mxu0 0.0
        %531 = vmatpush1.msra.mxu0 %v495
        %532 = vmatprep.subr.mxu0 0.0
        %533 = vmatpush1.msra.mxu0 %v496
        %534 = vmatprep.subr.mxu0 0.0
        %535 = vmatpush1.msra.mxu0 %v497
        %536 = vmatprep.subr.mxu0 0.0
        %537 = vmatpush1.msra.mxu0 %v498
        %538 = vmatprep.subr.mxu0 0.0
        %539 = vmatpush1.msra.mxu0 0.0
        %540 = vmatprep.subr.mxu0 0.0
        %541 = vmatpush1.msra.mxu0 0.0
        %542 = vmatprep.subr.mxu0 0.0
        %543 = vmatpush1.msra.mxu0 0.0
        %544 = vmatprep.subr.mxu0 0.0
        %545 = vmatpush1.msra.mxu0 0.0
        %546 = vmatprep.subr.mxu0 0.0
        %547 = vmatpush1.msra.mxu0 0.0
        %548 = vmatprep.subr.mxu0 0.0
        %549 = vmatpush1.msra.mxu0 0.0
        %550 = vmatprep.subr.mxu0 0.0
        %551 = vmatpush1.msra.mxu0 0.0
        %552 = vmatprep.subr.mxu0 0.0
        %553 = vmatpush1.msra.mxu0 0.0
        %554 = vmatprep.subr.mxu0 0.0
        %555 = vmatpush1.msra.mxu0 0.0
        %556 = vmatprep.subr.mxu0 0.0
        %557 = vmatpush1.msra.mxu0 0.0
        %558 = vmatprep.subr.mxu0 0.0
        %559 = vmatpush1.msra.mxu0 0.0
        %560 = vmatprep.subr.mxu0 0.0
        %561 = vmatpush1.msra.mxu0 0.0
        %562 = vmatprep.subr.mxu0 0.0
        %563 = vmatpush1.msra.mxu0 0.0
        %564 = vmatprep.subr.mxu0 0.0
        %565 = vmatpush1.msra.mxu0 0.0
        %566 = vmatprep.subr.mxu0 0.0
        %567 = vmatpush1.msra.mxu0 0.0
        %568 = vmatprep.subr.mxu0 0.0
        %569 = vmatpush1.msra.mxu0 0.0
        %570 = vmatprep.subr.mxu0 0.0
        %571 = vmatpush1.msra.mxu0 0.0
        %572 = vmatprep.subr.mxu0 0.0
        %573 = vmatpush1.msra.mxu0 0.0
        %574 = vmatprep.subr.mxu0 0.0
        %575 = vmatpush1.msra.mxu0 0.0
        %576 = vmatprep.subr.mxu0 0.0
        %577 = vmatpush1.msra.mxu0 0.0
        %578 = vmatprep.subr.mxu0 0.0
        %579 = vmatpush1.msra.mxu0 0.0
        %580 = vmatprep.subr.mxu0 0.0
        %581 = vmatpush1.msra.mxu0 0.0
        %582 = vmatprep.subr.mxu0 0.0
        %583 = vmatpush1.msra.mxu0 0.0
        %584 = vmatprep.subr.mxu0 0.0
        %585 = vmatpush1.msra.mxu0 0.0
        %586 = vmatprep.subr.mxu0 0.0
        %587 = vmatpush1.msra.mxu0 0.0
        %588 = vmatprep.subr.mxu0 0.0
        %589 = vmatpush1.msra.mxu0 0.0
        %590 = vmatprep.subr.mxu0 0.0
        %591 = vmatpush1.msra.mxu0 0.0
        %592 = vmatprep.subr.mxu0 0.0
        %593 = vmatpush1.msra.mxu0 0.0
        %594 = vmatprep.mubr.f32.mxu0 0.0
        %595 = vmatmul.mubr.f32.gmra.mrb[0].mxu0 %v528
        %v596 = vpop.f32.mrb[0].mxu0
        %v597 = vadd.f32 %v504, %v596
        %v598 = vpop.f32.mrb[0].mxu0
        %599 = vdwg.mxu0
        %v600 = vld [vmem:[%s4] sm:$0xff]
        %v601 = vld [vmem:[%s4 + $0x8] sm:$0xff]
        %v602 = vld [vmem:[%s4 + $0x10] sm:$0xff]
        %v603 = vld [vmem:[%s4 + $0x18] sm:$0xff]
        %v605 = vsel %vm438, %v597, 0
        %607 = vmatprep.subr.mxu0 0.0
        %608 = vmatpush1.msra.mxu0 %v600
        %609 = vmatprep.subr.mxu0 0.0
        %610 = vmatpush1.msra.mxu0 %v601
        %611 = vmatprep.subr.mxu0 0.0
        %612 = vmatpush1.msra.mxu0 %v602
        %613 = vmatprep.subr.mxu0 0.0
        %614 = vmatpush1.msra.mxu0 %v603
        %615 = vmatprep.subr.mxu0 0.0
        %616 = vmatpush1.msra.mxu0 0.0
        %617 = vmatprep.subr.mxu0 0.0
        %618 = vmatpush1.msra.mxu0 0.0
        %619 = vmatprep.subr.mxu0 0.0
        %620 = vmatpush1.msra.mxu0 0.0
        %621 = vmatprep.subr.mxu0 0.0
        %622 = vmatpush1.msra.mxu0 0.0
        %623 = vmatprep.subr.mxu0 0.0
        %624 = vmatpush1.msra.mxu0 0.0
        %625 = vmatprep.subr.mxu0 0.0
        %626 = vmatpush1.msra.mxu0 0.0
        %627 = vmatprep.subr.mxu0 0.0
        %628 = vmatpush1.msra.mxu0 0.0
        %629 = vmatprep.subr.mxu0 0.0
        %630 = vmatpush1.msra.mxu0 0.0
        %631 = vmatprep.subr.mxu0 0.0
        %632 = vmatpush1.msra.mxu0 0.0
        %633 = vmatprep.subr.mxu0 0.0
        %634 = vmatpush1.msra.mxu0 0.0
        %635 = vmatprep.subr.mxu0 0.0
        %636 = vmatpush1.msra.mxu0 0.0
        %637 = vmatprep.subr.mxu0 0.0
        %638 = vmatpush1.msra.mxu0 0.0
        %639 = vmatprep.subr.mxu0 0.0
        %640 = vmatpush1.msra.mxu0 0.0
        %641 = vmatprep.subr.mxu0 0.0
        %642 = vmatpush1.msra.mxu0 0.0
        %643 = vmatprep.subr.mxu0 0.0
        %644 = vmatpush1.msra.mxu0 0.0
        %645 = vmatprep.subr.mxu0 0.0
        %646 = vmatpush1.msra.mxu0 0.0
        %647 = vmatprep.subr.mxu0 0.0
        %648 = vmatpush1.msra.mxu0 0.0
        %649 = vmatprep.subr.mxu0 0.0
        %650 = vmatpush1.msra.mxu0 0.0
        %651 = vmatprep.subr.mxu0 0.0
        %652 = vmatpush1.msra.mxu0 0.0
        %653 = vmatprep.subr.mxu0 0.0
        %654 = vmatpush1.msra.mxu0 0.0
        %655 = vmatprep.subr.mxu0 0.0
        %656 = vmatpush1.msra.mxu0 0.0
        %657 = vmatprep.subr.mxu0 0.0
        %658 = vmatpush1.msra.mxu0 0.0
        %659 = vmatprep.subr.mxu0 0.0
        %660 = vmatpush1.msra.mxu0 0.0
        %661 = vmatprep.subr.mxu0 0.0
        %662 = vmatpush1.msra.mxu0 0.0
        %663 = vmatprep.subr.mxu0 0.0
        %664 = vmatpush1.msra.mxu0 0.0
        %665 = vmatprep.subr.mxu0 0.0
        %666 = vmatpush1.msra.mxu0 0.0
        %667 = vmatprep.subr.mxu0 0.0
        %668 = vmatpush1.msra.mxu0 0.0
        %669 = vmatprep.subr.mxu0 0.0
        %670 = vmatpush1.msra.mxu0 0.0
        %671 = vmatprep.mubr.f32.mxu0 0.0
        %672 = vmatmul.mubr.f32.gmra.mrb[0].mxu0 %v605
        %v673 = vpop.f32.mrb[0].mxu0
        %v674 = vadd.f32 0.0, %v673
        %v675 = vpop.f32.mrb[0].mxu0
        %676 = vdwg.mxu0
        %v678 = vcombine.high %v674, %v674
        %v680 = vunpack.c.l.s4 1966171168
        %v681 = vunpack.c.0.s8 %v680
        %v682 = vlaneseq
        %v683 = vshrl.u32 %v682, 7
        %v684 = vsub.s32 %v681, %v683
        %v685 = vrot.slane %v674, %v684
        %v687 = vunpack.c.l.s4 1966171168
        %v688 = vunpack.c.0.s8 %v687
        %v689 = vlaneseq
        %v690 = vshrl.u32 %v689, 7
        %v691 = vsub.s32 %v688, %v690
        %v692 = vrot.slane %v678, %v691
        %v693 = vcombine.high %v685, %v685
        %v694 = vcombine.high %v692, %v692
        %v696 = vunpack.c.l.s4 1966171168
        %v697 = vunpack.c.0.s8 %v696
        %v698 = vlaneseq
        %v699 = vshrl.u32 %v698, 7
        %v700 = vsub.s32 %v697, %v699
        %v701 = vrot.slane %v685, %v700
        %v703 = vunpack.c.l.s4 1966171168
        %v704 = vunpack.c.0.s8 %v703
        %v705 = vlaneseq
        %v706 = vshrl.u32 %v705, 7
        %v707 = vsub.s32 %v704, %v706
        %v708 = vrot.slane %v692, %v707
        %v710 = vunpack.c.l.s4 1966171168
        %v711 = vunpack.c.0.s8 %v710
        %v712 = vlaneseq
        %v713 = vshrl.u32 %v712, 7
        %v714 = vsub.s32 %v711, %v713
        %v715 = vrot.slane %v693, %v714
        %v717 = vunpack.c.l.s4 1966171168
        %v718 = vunpack.c.0.s8 %v717
        %v719 = vlaneseq
        %v720 = vshrl.u32 %v719, 7
        %v721 = vsub.s32 %v718, %v720
        %v722 = vrot.slane %v694, %v721
        %v723 = vcombine.high %v701, %v701
        %v724 = vcombine.high %v708, %v708
        %v725 = vcombine.high %v715, %v715
        %v726 = vcombine.high %v722, %v722
        %v727 = vlaneseq
        %v728 = vshrl.u32 %v727, 7
        %v729 = vsub.s32 0, %v728
        %v730 = vrot.slane %v701, %v729
        %v731 = vlaneseq
        %v732 = vshrl.u32 %v731, 7
        %v733 = vsub.s32 0, %v732
        %v734 = vrot.slane %v715, %v733
        %v735 = vlaneseq
        %v736 = vshrl.u32 %v735, 7
        %v737 = vsub.s32 0, %v736
        %v738 = vrot.slane %v723, %v737
        %v739 = vlaneseq
        %v740 = vshrl.u32 %v739, 7
        %v741 = vsub.s32 0, %v740
        %v742 = vrot.slane %v725, %v741
        %v743 = vlaneseq
        %v744 = vshrl.u32 %v743, 7
        %v745 = vsub.s32 0, %v744
        %v746 = vrot.slane %v708, %v745
        %v747 = vlaneseq
        %v748 = vshrl.u32 %v747, 7
        %v749 = vsub.s32 0, %v748
        %v750 = vrot.slane %v722, %v749
        %v751 = vlaneseq
        %v752 = vshrl.u32 %v751, 7
        %v753 = vsub.s32 0, %v752
        %v754 = vrot.slane %v724, %v753
        %v755 = vlaneseq
        %v756 = vshrl.u32 %v755, 7
        %v757 = vsub.s32 0, %v756
        %v758 = vrot.slane %v726, %v757
        %v767 = vmul.f32 %v730, %v342
        %v768 = vmul.f32 %v734, %v343
        %v769 = vmul.f32 %v738, %v344
        %v770 = vmul.f32 %v742, %v345
        %v771 = vmul.f32 %v746, %v346
        %v772 = vmul.f32 %v750, %v347
        %v773 = vmul.f32 %v754, %v348
        %v774 = vmul.f32 %v758, %v349
        %v775 = vsel %vm438, %v767, 0.0
        %776 = vadd.xlane.f32.xlu0 %v775
        %v777 = vpop.xlane.xlu0 %776
        %v778 = vsel %vm438, %v768, 0.0
        %779 = vadd.xlane.f32.xlu0 %v778
        %v780 = vpop.xlane.xlu0 %779
        %v781 = vsel %vm438, %v769, 0.0
        %782 = vadd.xlane.f32.xlu0 %v781
        %v783 = vpop.xlane.xlu0 %782
        %v784 = vsel %vm438, %v770, 0.0
        %785 = vadd.xlane.f32.xlu0 %v784
        %v786 = vpop.xlane.xlu0 %785
        %v787 = vsel %vm438, %v771, 0.0
        %788 = vadd.xlane.f32.xlu0 %v787
        %v789 = vpop.xlane.xlu0 %788
        %v790 = vsel %vm438, %v772, 0.0
        %791 = vadd.xlane.f32.xlu0 %v790
        %v792 = vpop.xlane.xlu0 %791
        %v793 = vsel %vm438, %v773, 0.0
        %794 = vadd.xlane.f32.xlu0 %v793
        %v795 = vpop.xlane.xlu0 %794
        %v796 = vsel %vm438, %v774, 0.0
        %797 = vadd.xlane.f32.xlu0 %v796
        %v798 = vpop.xlane.xlu0 %797
        %v799 = vld [vmem:[%s5] sm:$0x1]
        %v801 = vlaneseq
        %v802 = vshrl.u32 %v801, 7
        %v803 = vsub.s32 0, %v802
        %v804 = vrot.slane %v799, %v803
        %v806 = vmul.f32 %v597, %v804
        %v807 = vsel %vm438, %v806, 0.0
        %808 = vadd.xlane.f32.xlu0 %v807
        %v809 = vpop.xlane.xlu0 %808
        %v811 = vlaneseq
        %v812 = vshrl.u32 %v811, 7
        %v813 = vsub.s32 0, %v812
        %v814 = vrot.slane %v809, %v813
        %v815 = vlaneseq
        %v816 = vshrl.u32 %v815, 7
        %v817 = vsub.s32 1, %v816
        %v818 = vrot.slane %v809, %v817
        %v819 = vlaneseq
        %v820 = vshrl.u32 %v819, 7
        %v821 = vsub.s32 2, %v820
        %v822 = vrot.slane %v809, %v821
        %v823 = vlaneseq
        %v824 = vshrl.u32 %v823, 7
        %v825 = vsub.s32 3, %v824
        %v826 = vrot.slane %v809, %v825
        %v827 = vlaneseq
        %v828 = vshrl.u32 %v827, 7
        %v829 = vsub.s32 4, %v828
        %v830 = vrot.slane %v809, %v829
        %v831 = vlaneseq
        %v832 = vshrl.u32 %v831, 7
        %v833 = vsub.s32 5, %v832
        %v834 = vrot.slane %v809, %v833
        %v835 = vlaneseq
        %v836 = vshrl.u32 %v835, 7
        %v837 = vsub.s32 6, %v836
        %v838 = vrot.slane %v809, %v837
        %v839 = vlaneseq
        %v840 = vshrl.u32 %v839, 7
        %v841 = vsub.s32 7, %v840
        %v842 = vrot.slane %v809, %v841
        %v851 = vadd.f32 %v777, %v814
        %v852 = vadd.f32 %v780, %v818
        %v853 = vadd.f32 %v783, %v822
        %v854 = vadd.f32 %v786, %v826
        %v855 = vadd.f32 %v789, %v830
        %v856 = vadd.f32 %v792, %v834
        %v857 = vadd.f32 %v795, %v838
        %v858 = vadd.f32 %v798, %v842
        %867 = vset.pattern.permute.xlu0 0
        %868 = vperm.xlu0 %867, %v851
        %v869 = vpop.permute.xlu0 %868
        %870 = vset.pattern.permute.xlu0 0
        %871 = vperm.xlu0 %870, %v852
        %v872 = vpop.permute.xlu0 %871
        %873 = vset.pattern.permute.xlu0 0
        %874 = vperm.xlu0 %873, %v853
        %v875 = vpop.permute.xlu0 %874
        %876 = vset.pattern.permute.xlu0 0
        %877 = vperm.xlu0 %876, %v854
        %v878 = vpop.permute.xlu0 %877
        %879 = vset.pattern.permute.xlu0 0
        %880 = vperm.xlu0 %879, %v855
        %v881 = vpop.permute.xlu0 %880
        %882 = vset.pattern.permute.xlu0 0
        %883 = vperm.xlu0 %882, %v856
        %v884 = vpop.permute.xlu0 %883
        %885 = vset.pattern.permute.xlu0 0
        %886 = vperm.xlu0 %885, %v857
        %v887 = vpop.permute.xlu0 %886
        %888 = vset.pattern.permute.xlu0 0
        %889 = vperm.xlu0 %888, %v858
        %v890 = vpop.permute.xlu0 %889
        %v891 = vlaneseq
        %v892 = vshrl.u32 %v891, 7
        %v893 = vsub.s32 %v366, %v892
        %v894 = vrot.slane %v869, %v893
        %v895 = vlaneseq
        %v896 = vshrl.u32 %v895, 7
        %v897 = vsub.s32 %v366, %v896
        %v898 = vrot.slane %v872, %v897
        %v899 = vlaneseq
        %v900 = vshrl.u32 %v899, 7
        %v901 = vsub.s32 %v366, %v900
        %v902 = vrot.slane %v875, %v901
        %v903 = vlaneseq
        %v904 = vshrl.u32 %v903, 7
        %v905 = vsub.s32 %v366, %v904
        %v906 = vrot.slane %v878, %v905
        %v907 = vlaneseq
        %v908 = vshrl.u32 %v907, 7
        %v909 = vsub.s32 %v366, %v908
        %v910 = vrot.slane %v881, %v909
        %v911 = vlaneseq
        %v912 = vshrl.u32 %v911, 7
        %v913 = vsub.s32 %v366, %v912
        %v914 = vrot.slane %v884, %v913
        %v915 = vlaneseq
        %v916 = vshrl.u32 %v915, 7
        %v917 = vsub.s32 %v366, %v916
        %v918 = vrot.slane %v887, %v917
        %v919 = vlaneseq
        %v920 = vshrl.u32 %v919, 7
        %v921 = vsub.s32 %v366, %v920
        %v922 = vrot.slane %v890, %v921
        %v923 = vsel %vm514, %v898, %v894
        %v924 = vsel %vm516, %v902, %v923
        %v925 = vsel %vm518, %v906, %v924
        %v926 = vsel %vm520, %v910, %v925
        %v927 = vsel %vm522, %v914, %v926
        %v928 = vsel %vm524, %v918, %v927
        %v929 = vsel %vm526, %v922, %v928
        %v931 = vsel %vm371, %v929, -1e+30
        %v932 = vsel %vm351, %v931, -inf
        %933 = vmax.xlane.f32.xlu0 %v932
        %v934 = vpop.xlane.xlu0 %933
        %v935 = vsub.f32 %v931, %v934
        %v936 = vmul.f32 %v935, 1.442695
        %v937 = vpow.pop %v936
        %v938 = vmul.f32 %v937, %v373
        %v939 = vsel %vm351, %v938, 0.0
        %940 = vadd.xlane.f32.xlu0 %v939
        %v941 = vpop.xlane.xlu0 %940
        %v942 = vmax.f32 %v941, 1e-30
        %v943 = vrcp.pop %v942
        %v944 = vmul.f32 %v938, %v943
        %v945 = vlaneseq
        %v946 = vshrl.u32 %v945, 7
        %v947 = vsub.s32 0, %v946
        %v948 = vrot.slane %v944, %v947
        %950 = vbcast.lane.b32.xlu0 %v948, 256
        %v951 = vpop.permute.xlu0 %950
        %v952 = vlaneseq
        %v953 = vshrl.u32 %v952, 7
        %v954 = vsub.s32 1, %v953
        %v955 = vrot.slane %v944, %v954
        %957 = vbcast.lane.b32.xlu0 %v955, 256
        %v958 = vpop.permute.xlu0 %957
        %v959 = vlaneseq
        %v960 = vshrl.u32 %v959, 7
        %v961 = vsub.s32 2, %v960
        %v962 = vrot.slane %v944, %v961
        %964 = vbcast.lane.b32.xlu0 %v962, 256
        %v965 = vpop.permute.xlu0 %964
        %v966 = vlaneseq
        %v967 = vshrl.u32 %v966, 7
        %v968 = vsub.s32 3, %v967
        %v969 = vrot.slane %v944, %v968
        %971 = vbcast.lane.b32.xlu0 %v969, 256
        %v972 = vpop.permute.xlu0 %971
        %v973 = vlaneseq
        %v974 = vshrl.u32 %v973, 7
        %v975 = vsub.s32 4, %v974
        %v976 = vrot.slane %v944, %v975
        %978 = vbcast.lane.b32.xlu0 %v976, 256
        %v979 = vpop.permute.xlu0 %978
        %v980 = vlaneseq
        %v981 = vshrl.u32 %v980, 7
        %v982 = vsub.s32 5, %v981
        %v983 = vrot.slane %v944, %v982
        %985 = vbcast.lane.b32.xlu0 %v983, 256
        %v986 = vpop.permute.xlu0 %985
        %v987 = vlaneseq
        %v988 = vshrl.u32 %v987, 7
        %v989 = vsub.s32 6, %v988
        %v990 = vrot.slane %v944, %v989
        %992 = vbcast.lane.b32.xlu0 %v990, 256
        %v993 = vpop.permute.xlu0 %992
        %v994 = vlaneseq
        %v995 = vshrl.u32 %v994, 7
        %v996 = vsub.s32 7, %v995
        %v997 = vrot.slane %v944, %v996
        %999 = vbcast.lane.b32.xlu0 %v997, 256
        %v1000 = vpop.permute.xlu0 %999
        %v1001 = vmul.f32 %v951, %v342
        %v1002 = vmul.f32 %v958, %v343
        %v1003 = vmul.f32 %v965, %v344
        %v1004 = vmul.f32 %v972, %v345
        %v1005 = vmul.f32 %v979, %v346
        %v1006 = vmul.f32 %v986, %v347
        %v1007 = vmul.f32 %v993, %v348
        %v1008 = vmul.f32 %v1000, %v349
        %v1009 = vsel %vm438, %v1001, 0.0
        %v1010 = vrot.slane %v1009, 4
        %v1011 = vadd.f32 %v1009, %v1010
        %v1012 = vrot.slane %v1011, 2
        %v1013 = vadd.f32 %v1011, %v1012
        %v1014 = vrot.slane %v1013, 1
        %v1015 = vadd.f32 %v1013, %v1014
        %v1016 = vsel %vm438, %v1002, 0.0
        %v1017 = vrot.slane %v1016, 4
        %v1018 = vadd.f32 %v1016, %v1017
        %v1019 = vrot.slane %v1018, 2
        %v1020 = vadd.f32 %v1018, %v1019
        %v1021 = vrot.slane %v1020, 1
        %v1022 = vadd.f32 %v1020, %v1021
        %v1023 = vsel %vm438, %v1003, 0.0
        %v1024 = vrot.slane %v1023, 4
        %v1025 = vadd.f32 %v1023, %v1024
        %v1026 = vrot.slane %v1025, 2
        %v1027 = vadd.f32 %v1025, %v1026
        %v1028 = vrot.slane %v1027, 1
        %v1029 = vadd.f32 %v1027, %v1028
        %v1030 = vsel %vm438, %v1004, 0.0
        %v1031 = vrot.slane %v1030, 4
        %v1032 = vadd.f32 %v1030, %v1031
        %v1033 = vrot.slane %v1032, 2
        %v1034 = vadd.f32 %v1032, %v1033
        %v1035 = vrot.slane %v1034, 1
        %v1036 = vadd.f32 %v1034, %v1035
        %v1037 = vsel %vm438, %v1005, 0.0
        %v1038 = vrot.slane %v1037, 4
        %v1039 = vadd.f32 %v1037, %v1038
        %v1040 = vrot.slane %v1039, 2
        %v1041 = vadd.f32 %v1039, %v1040
        %v1042 = vrot.slane %v1041, 1
        %v1043 = vadd.f32 %v1041, %v1042
        %v1044 = vsel %vm438, %v1006, 0.0
        %v1045 = vrot.slane %v1044, 4
        %v1046 = vadd.f32 %v1044, %v1045
        %v1047 = vrot.slane %v1046, 2
        %v1048 = vadd.f32 %v1046, %v1047
        %v1049 = vrot.slane %v1048, 1
        %v1050 = vadd.f32 %v1048, %v1049
        %v1051 = vsel %vm438, %v1007, 0.0
        %v1052 = vrot.slane %v1051, 4
        %v1053 = vadd.f32 %v1051, %v1052
        %v1054 = vrot.slane %v1053, 2
        %v1055 = vadd.f32 %v1053, %v1054
        %v1056 = vrot.slane %v1055, 1
        %v1057 = vadd.f32 %v1055, %v1056
        %v1058 = vsel %vm438, %v1008, 0.0
        %v1059 = vrot.slane %v1058, 4
        %v1060 = vadd.f32 %v1058, %v1059
        %v1061 = vrot.slane %v1060, 2
        %v1062 = vadd.f32 %v1060, %v1061
        %v1063 = vrot.slane %v1062, 1
        %v1064 = vadd.f32 %v1062, %v1063
        %v1065 = vld [vmem:[%s6] sm:$0xff]
        %v1066 = vld [vmem:[%s6 + $0x8] sm:$0xff]
        %v1067 = vld [vmem:[%s6 + $0x10] sm:$0xff]
        %v1068 = vld [vmem:[%s6 + $0x18] sm:$0xff]
        %v1069 = vld [vmem:[%s7] sm:$0x1]
        %v1071 = vlaneseq
        %v1072 = vshrl.u32 %v1071, 7
        %v1073 = vsub.s32 0, %v1072
        %v1074 = vrot.slane %v1069, %v1073
        %v1084 = vsel %vm514, %v1022, %v1015
        %v1085 = vsel %vm516, %v1029, %v1084
        %v1086 = vsel %vm518, %v1036, %v1085
        %v1087 = vsel %vm520, %v1043, %v1086
        %v1088 = vsel %vm522, %v1050, %v1087
        %v1089 = vsel %vm524, %v1057, %v1088
        %v1090 = vsel %vm526, %v1064, %v1089
        %v1091 = vsel %vm438, %v1090, 0
        %1093 = vmatprep.subr.mxu0 0.0
        %1094 = vmatpush1.msra.mxu0 %v1065
        %1095 = vmatprep.subr.mxu0 0.0
        %1096 = vmatpush1.msra.mxu0 %v1066
        %1097 = vmatprep.subr.mxu0 0.0
        %1098 = vmatpush1.msra.mxu0 %v1067
        %1099 = vmatprep.subr.mxu0 0.0
        %1100 = vmatpush1.msra.mxu0 %v1068
        %1101 = vmatprep.subr.mxu0 0.0
        %1102 = vmatpush1.msra.mxu0 0.0
        %1103 = vmatprep.subr.mxu0 0.0
        %1104 = vmatpush1.msra.mxu0 0.0
        %1105 = vmatprep.subr.mxu0 0.0
        %1106 = vmatpush1.msra.mxu0 0.0
        %1107 = vmatprep.subr.mxu0 0.0
        %1108 = vmatpush1.msra.mxu0 0.0
        %1109 = vmatprep.subr.mxu0 0.0
        %1110 = vmatpush1.msra.mxu0 0.0
        %1111 = vmatprep.subr.mxu0 0.0
        %1112 = vmatpush1.msra.mxu0 0.0
        %1113 = vmatprep.subr.mxu0 0.0
        %1114 = vmatpush1.msra.mxu0 0.0
        %1115 = vmatprep.subr.mxu0 0.0
        %1116 = vmatpush1.msra.mxu0 0.0
        %1117 = vmatprep.subr.mxu0 0.0
        %1118 = vmatpush1.msra.mxu0 0.0
        %1119 = vmatprep.subr.mxu0 0.0
        %1120 = vmatpush1.msra.mxu0 0.0
        %1121 = vmatprep.subr.mxu0 0.0
        %1122 = vmatpush1.msra.mxu0 0.0
        %1123 = vmatprep.subr.mxu0 0.0
        %1124 = vmatpush1.msra.mxu0 0.0
        %1125 = vmatprep.subr.mxu0 0.0
        %1126 = vmatpush1.msra.mxu0 0.0
        %1127 = vmatprep.subr.mxu0 0.0
        %1128 = vmatpush1.msra.mxu0 0.0
        %1129 = vmatprep.subr.mxu0 0.0
        %1130 = vmatpush1.msra.mxu0 0.0
        %1131 = vmatprep.subr.mxu0 0.0
        %1132 = vmatpush1.msra.mxu0 0.0
        %1133 = vmatprep.subr.mxu0 0.0
        %1134 = vmatpush1.msra.mxu0 0.0
        %1135 = vmatprep.subr.mxu0 0.0
        %1136 = vmatpush1.msra.mxu0 0.0
        %1137 = vmatprep.subr.mxu0 0.0
        %1138 = vmatpush1.msra.mxu0 0.0
        %1139 = vmatprep.subr.mxu0 0.0
        %1140 = vmatpush1.msra.mxu0 0.0
        %1141 = vmatprep.subr.mxu0 0.0
        %1142 = vmatpush1.msra.mxu0 0.0
        %1143 = vmatprep.subr.mxu0 0.0
        %1144 = vmatpush1.msra.mxu0 0.0
        %1145 = vmatprep.subr.mxu0 0.0
        %1146 = vmatpush1.msra.mxu0 0.0
        %1147 = vmatprep.subr.mxu0 0.0
        %1148 = vmatpush1.msra.mxu0 0.0
        %1149 = vmatprep.subr.mxu0 0.0
        %1150 = vmatpush1.msra.mxu0 0.0
        %1151 = vmatprep.subr.mxu0 0.0
        %1152 = vmatpush1.msra.mxu0 0.0
        %1153 = vmatprep.subr.mxu0 0.0
        %1154 = vmatpush1.msra.mxu0 0.0
        %1155 = vmatprep.subr.mxu0 0.0
        %1156 = vmatpush1.msra.mxu0 0.0
        %1157 = vmatprep.mubr.f32.mxu0 0.0
        %1158 = vmatmul.mubr.f32.gmra.mrb[0].mxu0 %v1091
        %v1159 = vpop.f32.mrb[0].mxu0
        %v1160 = vadd.f32 %v1074, %v1159
        %v1161 = vpop.f32.mrb[0].mxu0
        %1162 = vdwg.mxu0
        %v1163 = vtanh.pop %v1160
        %1164 = vst.msk [vmem:[%s336] sm:$0xff] %vm438, %v1163
        %s1165 = sand.u32 %s211, 1
        %s1166 = scalar_lea.sflag [#allocation4], %s1165
        %s1167 = sand.u32 %s211, 1
        %s1168 = smul.addr %s1167, 8
        %s1169 = scalar_lea.vmem [#allocation5], %s1168
        // Predicated region
        $region57: #{attention_forward.1} parent=51 // pred_check
          %p1170 = pneg %p221
        $region58: #{attention_forward.1} parent=51 // pred_check_branch
          %1172 = sbr.rel (%p1170) target = $region60
        $region59: #{attention_forward.1} parent=51 // pred_region
          %s1174 = ssub.s32 128, 128
          %1175 = vsyncadd %s1166, %s1174
          %s1176 = smul.addr %s25, 128
          %s1177 = scalar_lea.hbm %s8, %s1176
          %s1179 = sshll.u32 %s1169, 4
          %s1180 = int_to_ptr.vmem [resolvable:$true] %s1179
          %1182 = dma.vmem_to_hbm [thread:$0]  %s1180, 128, %s1177, %s1166
        $region60: #{attention_forward.1} parent=51 // pred_fallthru
          _
      $region52: #{attention_forward.1} parent=5 // pred_fallthru
        _
      %p1183 = scmp.le.s32.totalorder 2, %s20
      // Predicated region
      $region61: #{attention_forward.1} parent=5 // pred_check
        %p1184 = pneg %p1183
      $region62: #{attention_forward.1} parent=5 // pred_check_branch
        %1186 = sbr.rel (%p1184) target = $region64
      $region63: #{attention_forward.1} parent=5 // pred_region
        %s1187 = ssub.s32 %s20, 2
        // Predicated region
        $region65: #{attention_forward.1} parent=63 // pred_check
          %p1188 = pneg %p227
        $region66: #{attention_forward.1} parent=63 // pred_check_branch
          %1190 = sbr.rel (%p1188) target = $region68
        $region67: #{attention_forward.1} parent=63 // pred_region
          %s1191 = sand.u32 %s212, 1
          %s1192 = scalar_lea.sflag [#allocation4], %s1191
          %s1193 = sand.u32 %s212, 1
          %s1194 = smul.addr %s1193, 8
          %s1195 = scalar_lea.vmem [#allocation5], %s1194
          %1196 = dma.done %s1192, 128
        $region68: #{attention_forward.1} parent=63 // pred_fallthru
          _
      $region64: #{attention_forward.1} parent=5 // pred_fallthru
        _
    $region6: #{attention_forward.1} parent=1 // loop_footer
      %s24 = sadd.s32 1, %s20
    $region7: #{attention_forward.1} parent=1 // loop_footer_branch
      %19 = sbr.rel target = $region3
    $region8: #{attention_forward.1} parent=1 // loop_exit
      _
    %1197 = vsyncpa [#allocation3], 1
    %s1198 = scalar_lea.sflag [#allocation3], 1
    %1199 = vsyncpa %s1198, 1
    %1200 = vsyncpa [#allocation4], 1
    %s1201 = scalar_lea.sflag [#allocation4], 1
    %1202 = vsyncpa %s1201, 1

</llo_original>
